<compile_context>
chip_gen: v7x
topology: tpu7x:2x2x1
jax: 0.10.0
libtpu: 0.0.40
codegen_flags: <defaults>
</compile_context>

<pallas_src>
import functools

import jax
import jax.numpy as jnp
from jax.experimental import pallas as pl
from jax.experimental.pallas import tpu as pltpu


def _round_up(x: int, m: int) -> int:
    return (x + m - 1) // m * m


def _fused_mlp_kernel(*refs, n_layers: int):
    """Whole MLP on one (tm, d0) row tile.

    refs = (x, w_0..w_{L-1}, b_0..b_{L-1}, out).  Intermediates live only in
    VMEM / vregs; each matmul accumulates in f32 on the MXU, bias + SiLU are
    applied exactly once per layer (no K reduction axis here).
    """
    x_ref = refs[0]
    w_refs = refs[1:1 + n_layers]
    b_refs = refs[1 + n_layers:1 + 2 * n_layers]
    o_ref = refs[1 + 2 * n_layers]

    act = x_ref[...]
    for k in range(n_layers):
        w = w_refs[k][...]
        y = jnp.dot(act.astype(w.dtype), w, preferred_element_type=jnp.float32)
        y = y + b_refs[k][...].astype(jnp.float32)       # (1, tn) broadcast over rows
        if k != n_layers - 1:
            act = y * jax.nn.sigmoid(y)                  # SiLU in f32
        else:
            o_ref[...] = y.astype(o_ref.dtype)


def mlp_pallas(x, params, *, tm: int = 128):
    """Fused MLP forward: one pallas_call for the whole stack of layers.

    params: list of (w, b) with w of shape (d_in, d_out) (pre-transposed vs
            torch) and b of shape (1, d_out).
    """
    M, d0 = x.shape
    n_layers = len(params)
    dims = [d0] + [w.shape[1] for (w, _) in params]
    for k, (w, b) in enumerate(params):
        assert w.shape == (dims[k], dims[k + 1]), (w.shape, dims[k], dims[k + 1])
        assert b.shape == (1, dims[k + 1]), b.shape

    # Lane-pad every feature dim to a multiple of 128 (dense, unmasked stores,
    # full-width MXU tiles).
    dims_p = [_round_up(d, 128) for d in dims]

    # Row tile: 128 rows saturate the MXU; cap at the (8-aligned) batch so tiny
    # batches don't burn 16x padded compute.  Pad M up to a multiple of tm.
    m_pad8 = _round_up(M, 8)
    tm = min(tm, m_pad8)
    m_p = _round_up(m_pad8, tm)

    # Zero-pad activations / weights / biases.
    x_p = jnp.zeros((m_p, dims_p[0]), x.dtype).at[:M, :dims[0]].set(x)
    ws_p, bs_p = [], []
    for k, (w, b) in enumerate(params):
        wp = jnp.zeros((dims_p[k], dims_p[k + 1]), w.dtype)
        wp = wp.at[:dims[k], :dims[k + 1]].set(w)
        bp = jnp.zeros((1, dims_p[k + 1]), jnp.float32)
        bp = bp.at[:, :dims[k + 1]].set(b.astype(jnp.float32))
        ws_p.append(wp)
        bs_p.append(bp)

    grid = (m_p // tm,)

    # --- VMEM budget (weights stay fully resident; x/out tiles double-buffer).
    weight_bytes = sum(int(w.size) * w.dtype.itemsize for w in ws_p)
    bias_bytes = sum(int(b.size) * b.dtype.itemsize for b in bs_p)
    act_bytes = x_p.dtype.itemsize * tm * dims_p[0] + 4 * tm * max(dims_p)
    out_tile_bytes = x.dtype.itemsize * tm * dims_p[-1]
    vmem_needed = 2 * (weight_bytes + bias_bytes) + 2 * (act_bytes + out_tile_bytes)
    assert vmem_needed < 48 * 2**20, (
        "resident weights too large for VMEM; needs N/K tiling (see TODO)")
    vmem_limit = int(min(max(2 * vmem_needed, 32 * 2**20), 56 * 2**20))  # v7x-safe

    # --- Cost estimate so XLA schedules around the fused call sensibly.
    flops = sum(2 * m_p * dims_p[k] * dims_p[k + 1] for k in range(n_layers))
    transcendentals = sum(m_p * dims_p[k + 1] for k in range(n_layers - 1))
    bytes_accessed = (int(x_p.size) * x_p.dtype.itemsize + weight_bytes
                      + bias_bytes + m_p * dims_p[-1] * x.dtype.itemsize)
    cost = pl.CostEstimate(flops=flops, transcendentals=transcendentals,
                           bytes_accessed=bytes_accessed)

    in_specs = [pl.BlockSpec((tm, dims_p[0]), lambda i: (i, 0))]          # x row tile
    for k in range(n_layers):
        in_specs.append(pl.BlockSpec((dims_p[k], dims_p[k + 1]),          # resident W_k
                                     lambda i: (0, 0)))
    for k in range(n_layers):
        in_specs.append(pl.BlockSpec((1, dims_p[k + 1]), lambda i: (0, 0)))  # bias_k
    out_spec = pl.BlockSpec((tm, dims_p[-1]), lambda i: (i, 0))

    kernel = functools.partial(_fused_mlp_kernel, n_layers=n_layers)
    out_p = pl.pallas_call(
        kernel,
        out_shape=jax.ShapeDtypeStruct((m_p, dims_p[-1]), x.dtype),
        grid_spec=pltpu.PrefetchScalarGridSpec(
            num_scalar_prefetch=0,
            grid=grid,
            in_specs=in_specs,
            out_specs=out_spec,
        ),
        compiler_params=pltpu.CompilerParams(
            dimension_semantics=("parallel",),   # row tiles shard across TCs (v7x)
            vmem_limit_bytes=vmem_limit,
        ),
        cost_estimate=cost,
    )(x_p, *ws_p, *bs_p)

    return out_p[:M, :dims[-1]]


def init_mlp_params(layer_vec, key, dtype=jnp.float32):
    """Parameter init mirroring nn.Linear (uniform +/- 1/sqrt(fan_in)).

    Weights are stored as (in_features, out_features) (pre-transposed).
    Pass dtype=jnp.bfloat16 for bf16 weights on v6e/v7x (f32 accumulation kept).
    """
    params = []
    for k in range(len(layer_vec) - 1):
        fan_in, fan_out = layer_vec[k], layer_vec[k + 1]
        key, kw, kb = jax.random.split(key, 3)
        bound = 1.0 / jnp.sqrt(fan_in)
        w = jax.random.uniform(kw, (fan_in, fan_out), jnp.float32, -bound, bound)
        b = jax.random.uniform(kb, (1, fan_out), jnp.float32, -bound, bound)
        params.append((w.astype(dtype), b.astype(jnp.float32)))
    return params


def mlp_reference(x, params):
    """Pure-JAX reference (Linear -> SiLU -> ... -> Linear, no final act)."""
    n_layers = len(params)
    for k, (w, b) in enumerate(params):
        x = x @ w.astype(x.dtype) + b
        if k != n_layers - 1:
            x = x * jax.nn.sigmoid(x)
    return x


if __name__ == "__main__":
    key = jax.random.PRNGKey(0)
    layer_vec = [32, 64, 64, 16]   # MLP([32, 64, 64, 16])
    batch = 8

    key, kx = jax.random.split(key)
    x = jax.random.normal(kx, (batch, layer_vec[0]), jnp.float32)
    params = init_mlp_params(layer_vec, key)

    out = mlp_pallas(x, params)
    out = jax.block_until_ready(out)

    ref = mlp_reference(x, params)
    assert out.shape == (batch, layer_vec[-1]), out.shape
    assert jnp.allclose(out, ref, atol=1e-5, rtol=1e-5), "mismatch vs reference"

    print("KERNEL_OK")
</pallas_src>

<mosaic_0001>
module attributes {stable_mosaic.version = 11 : i64} {
  func.func @_fused_mlp_kernel(%arg0: i32, %arg1: memref<8x128xf32, #tpu.memory_space<vmem>>, %arg2: memref<128x128xf32, #tpu.memory_space<vmem>>, %arg3: memref<128x128xf32, #tpu.memory_space<vmem>>, %arg4: memref<128x128xf32, #tpu.memory_space<vmem>>, %arg5: memref<1x128xf32, #tpu.memory_space<vmem>>, %arg6: memref<1x128xf32, #tpu.memory_space<vmem>>, %arg7: memref<1x128xf32, #tpu.memory_space<vmem>>, %arg8: memref<8x128xf32, #tpu.memory_space<vmem>>) attributes {dimension_semantics = [#tpu.dimension_semantics<parallel>], iteration_bounds = array<i64: 1>, scalar_prefetch = 0 : i64, scratch_operands = 0 : i64, tpu.core_type = #tpu.core_type<tc>, window_params = [{transform_indices = @transform_0, window_bounds = array<i64: 8, 128>}, {pipeline_mode = #tpu.pipeline_mode<synchronous>, transform_indices = @transform_1, window_bounds = array<i64: 128, 128>}, {pipeline_mode = #tpu.pipeline_mode<synchronous>, transform_indices = @transform_2, window_bounds = array<i64: 128, 128>}, {pipeline_mode = #tpu.pipeline_mode<synchronous>, transform_indices = @transform_3, window_bounds = array<i64: 128, 128>}, {pipeline_mode = #tpu.pipeline_mode<synchronous>, transform_indices = @transform_4, window_bounds = array<i64: 1, 128>}, {pipeline_mode = #tpu.pipeline_mode<synchronous>, transform_indices = @transform_5, window_bounds = array<i64: 1, 128>}, {pipeline_mode = #tpu.pipeline_mode<synchronous>, transform_indices = @transform_6, window_bounds = array<i64: 1, 128>}, {transform_indices = @transform_7, window_bounds = array<i64: 8, 128>}]} {
    %c0 = arith.constant 0 : index
    %c0_0 = arith.constant 0 : index
    %0 = vector.load %arg1[%c0, %c0_0] : memref<8x128xf32, #tpu.memory_space<vmem>>, vector<8x128xf32>
    %c0_1 = arith.constant 0 : index
    %c0_2 = arith.constant 0 : index
    %1 = vector.load %arg2[%c0_1, %c0_2] : memref<128x128xf32, #tpu.memory_space<vmem>>, vector<128x128xf32>
    %cst = arith.constant dense<0.000000e+00> : vector<8x128xf32>
    %2 = tpu.matmul %0, %1, %cst {dimension_numbers = #tpu.dot_dimension_numbers<[1], [0], [0], [1], [0, 0, 1, 1], [], []>} : vector<8x128xf32>, vector<128x128xf32>, vector<8x128xf32> -> vector<8x128xf32>
    %c0_3 = arith.constant 0 : index
    %c0_4 = arith.constant 0 : index
    %3 = vector.load %arg5[%c0_3, %c0_4] : memref<1x128xf32, #tpu.memory_space<vmem>>, vector<1x128xf32>
    %4 = vector.broadcast %3 : vector<1x128xf32> to vector<8x128xf32>
    %5 = arith.addf %2, %4 : vector<8x128xf32>
    %6 = arith.negf %5 : vector<8x128xf32>
    %7 = math.exp %6 : vector<8x128xf32>
    %cst_5 = arith.constant 1.000000e+00 : f32
    %8 = vector.broadcast %cst_5 : f32 to vector<8x128xf32>
    %9 = arith.addf %8, %7 : vector<8x128xf32>
    %10 = arith.divf %8, %9 : vector<8x128xf32>
    %11 = arith.mulf %5, %10 : vector<8x128xf32>
    %c0_6 = arith.constant 0 : index
    %c0_7 = arith.constant 0 : index
    %12 = vector.load %arg3[%c0_6, %c0_7] : memref<128x128xf32, #tpu.memory_space<vmem>>, vector<128x128xf32>
    %cst_8 = arith.constant dense<0.000000e+00> : vector<8x128xf32>
    %13 = tpu.matmul %11, %12, %cst_8 {dimension_numbers = #tpu.dot_dimension_numbers<[1], [0], [0], [1], [0, 0, 1, 1], [], []>} : vector<8x128xf32>, vector<128x128xf32>, vector<8x128xf32> -> vector<8x128xf32>
    %c0_9 = arith.constant 0 : index
    %c0_10 = arith.constant 0 : index
    %14 = vector.load %arg6[%c0_9, %c0_10] : memref<1x128xf32, #tpu.memory_space<vmem>>, vector<1x128xf32>
    %15 = vector.broadcast %14 : vector<1x128xf32> to vector<8x128xf32>
    %16 = arith.addf %13, %15 : vector<8x128xf32>
    %17 = arith.negf %16 : vector<8x128xf32>
    %18 = math.exp %17 : vector<8x128xf32>
    %cst_11 = arith.constant 1.000000e+00 : f32
    %19 = vector.broadcast %cst_11 : f32 to vector<8x128xf32>
    %20 = arith.addf %19, %18 : vector<8x128xf32>
    %21 = arith.divf %19, %20 : vector<8x128xf32>
    %22 = arith.mulf %16, %21 : vector<8x128xf32>
    %c0_12 = arith.constant 0 : index
    %c0_13 = arith.constant 0 : index
    %23 = vector.load %arg4[%c0_12, %c0_13] : memref<128x128xf32, #tpu.memory_space<vmem>>, vector<128x128xf32>
    %cst_14 = arith.constant dense<0.000000e+00> : vector<8x128xf32>
    %24 = tpu.matmul %22, %23, %cst_14 {dimension_numbers = #tpu.dot_dimension_numbers<[1], [0], [0], [1], [0, 0, 1, 1], [], []>} : vector<8x128xf32>, vector<128x128xf32>, vector<8x128xf32> -> vector<8x128xf32>
    %c0_15 = arith.constant 0 : index
    %c0_16 = arith.constant 0 : index
    %25 = vector.load %arg7[%c0_15, %c0_16] : memref<1x128xf32, #tpu.memory_space<vmem>>, vector<1x128xf32>
    %26 = vector.broadcast %25 : vector<1x128xf32> to vector<8x128xf32>
    %27 = arith.addf %24, %26 : vector<8x128xf32>
    %c0_17 = arith.constant 0 : index
    %c0_18 = arith.constant 0 : index
    %28 = vector.load %arg8[%c0_17, %c0_18] : memref<8x128xf32, #tpu.memory_space<vmem>>, vector<8x128xf32>
    tpu.vector_store %arg8[%c0_17, %c0_18], %27 {strides = array<i32>} : memref<8x128xf32, #tpu.memory_space<vmem>>, vector<8x128xf32>,
    return
  }
  func.func @transform_0(%arg0: i32) -> (i32, i32) {
    %c0_i32 = arith.constant 0 : i32
    %c0_i32_0 = arith.constant 0 : i32
    return %arg0, %c0_i32 : i32, i32
  }
  func.func @transform_1(%arg0: i32) -> (i32, i32) {
    %c0_i32 = arith.constant 0 : i32
    %c0_i32_0 = arith.constant 0 : i32
    %c0_i32_1 = arith.constant 0 : i32
    return %c0_i32, %c0_i32_0 : i32, i32
  }
  func.func @transform_2(%arg0: i32) -> (i32, i32) {
    %c0_i32 = arith.constant 0 : i32
    %c0_i32_0 = arith.constant 0 : i32
    %c0_i32_1 = arith.constant 0 : i32
    return %c0_i32, %c0_i32_0 : i32, i32
  }
  func.func @transform_3(%arg0: i32) -> (i32, i32) {
    %c0_i32 = arith.constant 0 : i32
    %c0_i32_0 = arith.constant 0 : i32
    %c0_i32_1 = arith.constant 0 : i32
    return %c0_i32, %c0_i32_0 : i32, i32
  }
  func.func @transform_4(%arg0: i32) -> (i32, i32) {
    %c0_i32 = arith.constant 0 : i32
    %c0_i32_0 = arith.constant 0 : i32
    %c0_i32_1 = arith.constant 0 : i32
    return %c0_i32, %c0_i32_0 : i32, i32
  }
  func.func @transform_5(%arg0: i32) -> (i32, i32) {
    %c0_i32 = arith.constant 0 : i32
    %c0_i32_0 = arith.constant 0 : i32
    %c0_i32_1 = arith.constant 0 : i32
    return %c0_i32, %c0_i32_0 : i32, i32
  }
  func.func @transform_6(%arg0: i32) -> (i32, i32) {
    %c0_i32 = arith.constant 0 : i32
    %c0_i32_0 = arith.constant 0 : i32
    %c0_i32_1 = arith.constant 0 : i32
    return %c0_i32, %c0_i32_0 : i32, i32
  }
  func.func @transform_7(%arg0: i32) -> (i32, i32) {
    %c0_i32 = arith.constant 0 : i32
    %c0_i32_0 = arith.constant 0 : i32
    return %arg0, %c0_i32 : i32, i32
  }
}

</mosaic_0001>

<llo_original>
// kernel: tpu_custom_call.1
$region0: #{tpu_custom_call.1}
  #allocation0 [shape = 'u32[]', space=smem, size = 0x4, offset = 0x4, fixed_abs, tag = 'smem constant byte address 0x4 - core index']
  #allocation1 [shape = 'u32[144,128]{1,0:T(1,128)}', space=vmem, size = 0x12000, scoped, tag = 'internal scratch']
  %s0 = inlined_call_operand.hbm [shape: f32[8,128], index: 0, kind: input, shape index: {}]
  %s1 = inlined_call_operand.hbm [shape: f32[128,128], index: 1, kind: input, shape index: {}]
  %s2 = inlined_call_operand.hbm [shape: f32[128,128], index: 2, kind: input, shape index: {}]
  %s3 = inlined_call_operand.hbm [shape: f32[128,128], index: 3, kind: input, shape index: {}]
  %s4 = inlined_call_operand.vmem [shape: f32[1,128], index: 4, kind: input, shape index: {}]
  %s5 = inlined_call_operand.vmem [shape: f32[1,128], index: 5, kind: input, shape index: {}]
  %s6 = inlined_call_operand.vmem [shape: f32[1,128], index: 6, kind: input, shape index: {}]
  %s7 = inlined_call_operand.hbm [shape: f32[8,128], index: 7, kind: output, shape index: {}]
  %s8 = sld [smem:[#allocation0]]
  $region54: #{tpu_custom_call.1} parent=0
    _
  %s10 = ssub.s32 1, %s8
  %s11 = scalar_select 0, %s10, %s8
  $region1: #{tpu_custom_call.1} parent=0
    #allocation2 [shape = 'u8[4096]{0}', space=vmem, size = 0x1000, scoped, tag = 'input window, operand 0, single buffered']
    #allocation3 [shape = 's32[1]{0}', space=sflag, size = 0x4, scoped, tag = 'scoped memory for tpu_custom_call.1']
    #allocation4 [shape = 's32[1]{0}', space=sflag, size = 0x4, scoped, tag = 'scoped memory for tpu_custom_call.1']
    #allocation5 [shape = 'u8[65536]{0}', space=vmem, size = 0x10000, scoped, tag = 'input window, operand 1, single buffered']
    #allocation6 [shape = 's32[1]{0}', space=sflag, size = 0x4, scoped, tag = 'scoped memory for tpu_custom_call.1']
    #allocation7 [shape = 'u8[65536]{0}', space=vmem, size = 0x10000, scoped, tag = 'input window, operand 2, single buffered']
    #allocation8 [shape = 'u8[65536]{0}', space=vmem, size = 0x10000, scoped, tag = 'input window, operand 3, single buffered']
    #allocation9 [shape = 's32[1]{0}', space=sflag, size = 0x4, scoped, tag = 'scoped memory for tpu_custom_call.1']
    #allocation10 [shape = 'u8[4096]{0}', space=vmem, size = 0x1000, scoped, tag = 'output window, operand 0, single buffered']
    %12 = vsyncpa [#allocation3], 0
    %13 = vsyncpa [#allocation6], 0
    %14 = vsyncpa [#allocation9], 0
    %15 = vsyncpa [#allocation4], 0
    // Predicated region
    $region2: #{tpu_custom_call.1} parent=1 // pred_check
      _
    $region3: #{tpu_custom_call.1} parent=1 // pred_check_branch
      %17 = sbr.rel (0) target = $region5
    $region4: #{tpu_custom_call.1} parent=1 // pred_region
      %s19 = ssub.s32 128, 128
      %20 = vsyncadd [#allocation3], %s19
      %s22 = sshll.u32 [#allocation2], 4
      %s23 = int_to_ptr.vmem [resolvable:$true] %s22
      %25 = dma.hbm_to_vmem [thread:$0]  %s0, 128, %s23, [#allocation3]
    $region5: #{tpu_custom_call.1} parent=1 // pred_fallthru
      _
    // Predicated region
    $region6: #{tpu_custom_call.1} parent=1 // pred_check
      _
    $region7: #{tpu_custom_call.1} parent=1 // pred_check_branch
      %27 = sbr.rel (0) target = $region9
    $region8: #{tpu_custom_call.1} parent=1 // pred_region
      %s29 = ssub.s32 2048, 2048
      %30 = vsyncadd [#allocation6], %s29
      %s31 = sshll.u32 [#allocation5], 4
      %s32 = int_to_ptr.vmem [resolvable:$true] %s31
      %37 = dma.hbm_to_vmem [thread:$0]  %s1, 2048, %s32, [#allocation6], 128, 128, 8
    $region9: #{tpu_custom_call.1} parent=1 // pred_fallthru
      _
    // Predicated region
    $region10: #{tpu_custom_call.1} parent=1 // pred_check
      _
    $region11: #{tpu_custom_call.1} parent=1 // pred_check_branch
      %39 = sbr.rel (0) target = $region13
    $region12: #{tpu_custom_call.1} parent=1 // pred_region
      %s41 = ssub.s32 2048, 2048
      %42 = vsyncadd [#allocation6], %s41
      %s43 = sshll.u32 [#allocation7], 4
      %s44 = int_to_ptr.vmem [resolvable:$true] %s43
      %49 = dma.hbm_to_vmem [thread:$0]  %s2, 2048, %s44, [#allocation6], 128, 128, 8
    $region13: #{tpu_custom_call.1} parent=1 // pred_fallthru
      _
    // Predicated region
    $region14: #{tpu_custom_call.1} parent=1 // pred_check
      _
    $region15: #{tpu_custom_call.1} parent=1 // pred_check_branch
      %51 = sbr.rel (0) target = $region17
    $region16: #{tpu_custom_call.1} parent=1 // pred_region
      %s53 = ssub.s32 2048, 2048
      %54 = vsyncadd [#allocation9], %s53
      %s55 = sshll.u32 [#allocation8], 4
      %s56 = int_to_ptr.vmem [resolvable:$true] %s55
      %61 = dma.hbm_to_vmem [thread:$0]  %s3, 2048, %s56, [#allocation9], 128, 128, 8
    $region17: #{tpu_custom_call.1} parent=1 // pred_fallthru
      _
    // Predicated region
    $region18: #{tpu_custom_call.1} parent=1 // pred_check
      _
    $region19: #{tpu_custom_call.1} parent=1 // pred_check_branch
      %63 = sbr.rel (0) target = $region21
    $region20: #{tpu_custom_call.1} parent=1 // pred_region
      _
    $region21: #{tpu_custom_call.1} parent=1 // pred_fallthru
      _
    // Predicated region
    $region22: #{tpu_custom_call.1} parent=1 // pred_check
      _
    $region23: #{tpu_custom_call.1} parent=1 // pred_check_branch
      %65 = sbr.rel (0) target = $region25
    $region24: #{tpu_custom_call.1} parent=1 // pred_region
      _
    $region25: #{tpu_custom_call.1} parent=1 // pred_fallthru
      _
    // Predicated region
    $region26: #{tpu_custom_call.1} parent=1 // pred_check
      _
    $region27: #{tpu_custom_call.1} parent=1 // pred_check_branch
      %67 = sbr.rel (0) target = $region29
    $region28: #{tpu_custom_call.1} parent=1 // pred_region
      _
    $region29: #{tpu_custom_call.1} parent=1 // pred_fallthru
      _
    // Predicated region
    $region30: #{tpu_custom_call.1} parent=1 // pred_check
      _
    $region31: #{tpu_custom_call.1} parent=1 // pred_check_branch
      %69 = sbr.rel (0) target = $region33
    $region32: #{tpu_custom_call.1} parent=1 // pred_region
      %70 = dma.done [#allocation3], 128
    $region33: #{tpu_custom_call.1} parent=1 // pred_fallthru
      _
    // Predicated region
    $region34: #{tpu_custom_call.1} parent=1 // pred_check
      _
    $region35: #{tpu_custom_call.1} parent=1 // pred_check_branch
      %72 = sbr.rel (0) target = $region37
    $region36: #{tpu_custom_call.1} parent=1 // pred_region
      %73 = dma.done [#allocation6], 2048
    $region37: #{tpu_custom_call.1} parent=1 // pred_fallthru
      _
    // Predicated region
    $region38: #{tpu_custom_call.1} parent=1 // pred_check
      _
    $region39: #{tpu_custom_call.1} parent=1 // pred_check_branch
      %75 = sbr.rel (0) target = $region41
    $region40: #{tpu_custom_call.1} parent=1 // pred_region
      %76 = dma.done [#allocation6], 2048
    $region41: #{tpu_custom_call.1} parent=1 // pred_fallthru
      _
    // Predicated region
    $region42: #{tpu_custom_call.1} parent=1 // pred_check
      _
    $region43: #{tpu_custom_call.1} parent=1 // pred_check_branch
      %78 = sbr.rel (0) target = $region45
    $region44: #{tpu_custom_call.1} parent=1 // pred_region
      %79 = dma.done [#allocation9], 2048
    $region45: #{tpu_custom_call.1} parent=1 // pred_fallthru
      _
    %v80 = vld [vmem:[#allocation2] sm:$0xff]
    %v81 = vld [vmem:[#allocation5] sm:$0xff]
    %v82 = vld [vmem:[#allocation5 + $0x8] sm:$0xff]
    %v83 = vld [vmem:[#allocation5 + $0x10] sm:$0xff]
    %v84 = vld [vmem:[#allocation5 + $0x18] sm:$0xff]
    %v85 = vld [vmem:[#allocation5 + $0x20] sm:$0xff]
    %v86 = vld [vmem:[#allocation5 + $0x28] sm:$0xff]
    %v87 = vld [vmem:[#allocation5 + $0x30] sm:$0xff]
    %v88 = vld [vmem:[#allocation5 + $0x38] sm:$0xff]
    %v89 = vld [vmem:[#allocation5 + $0x40] sm:$0xff]
    %v90 = vld [vmem:[#allocation5 + $0x48] sm:$0xff]
    %v91 = vld [vmem:[#allocation5 + $0x50] sm:$0xff]
    %v92 = vld [vmem:[#allocation5 + $0x58] sm:$0xff]
    %v93 = vld [vmem:[#allocation5 + $0x60] sm:$0xff]
    %v94 = vld [vmem:[#allocation5 + $0x68] sm:$0xff]
    %v95 = vld [vmem:[#allocation5 + $0x70] sm:$0xff]
    %v96 = vld [vmem:[#allocation5 + $0x78] sm:$0xff]
    %v97 = vld [vmem:[%s4] sm:$0x1]
    %v99 = vlaneseq
    %v100 = vshrl.u32 %v99, 7
    %v101 = vsub.s32 0, %v100
    %v102 = vrot.slane %v97, %v101
    %104 = vmatprep.subr.mxu0 0.0
    %105 = vmatpush1.msra.mxu0 %v81
    %106 = vmatprep.subr.mxu0 0.0
    %107 = vmatpush1.msra.mxu0 %v82
    %108 = vmatprep.subr.mxu0 0.0
    %109 = vmatpush1.msra.mxu0 %v83
    %110 = vmatprep.subr.mxu0 0.0
    %111 = vmatpush1.msra.mxu0 %v84
    %112 = vmatprep.subr.mxu0 0.0
    %113 = vmatpush1.msra.mxu0 %v85
    %114 = vmatprep.subr.mxu0 0.0
    %115 = vmatpush1.msra.mxu0 %v86
    %116 = vmatprep.subr.mxu0 0.0
    %117 = vmatpush1.msra.mxu0 %v87
    %118 = vmatprep.subr.mxu0 0.0
    %119 = vmatpush1.msra.mxu0 %v88
    %120 = vmatprep.subr.mxu0 0.0
    %121 = vmatpush1.msra.mxu0 %v89
    %122 = vmatprep.subr.mxu0 0.0
    %123 = vmatpush1.msra.mxu0 %v90
    %124 = vmatprep.subr.mxu0 0.0
    %125 = vmatpush1.msra.mxu0 %v91
    %126 = vmatprep.subr.mxu0 0.0
    %127 = vmatpush1.msra.mxu0 %v92
    %128 = vmatprep.subr.mxu0 0.0
    %129 = vmatpush1.msra.mxu0 %v93
    %130 = vmatprep.subr.mxu0 0.0
    %131 = vmatpush1.msra.mxu0 %v94
    %132 = vmatprep.subr.mxu0 0.0
    %133 = vmatpush1.msra.mxu0 %v95
    %134 = vmatprep.subr.mxu0 0.0
    %135 = vmatpush1.msra.mxu0 %v96
    %136 = vmatprep.subr.mxu0 0.0
    %137 = vmatpush1.msra.mxu0 0.0
    %138 = vmatprep.subr.mxu0 0.0
    %139 = vmatpush1.msra.mxu0 0.0
    %140 = vmatprep.subr.mxu0 0.0
    %141 = vmatpush1.msra.mxu0 0.0
    %142 = vmatprep.subr.mxu0 0.0
    %143 = vmatpush1.msra.mxu0 0.0
    %144 = vmatprep.subr.mxu0 0.0
    %145 = vmatpush1.msra.mxu0 0.0
    %146 = vmatprep.subr.mxu0 0.0
    %147 = vmatpush1.msra.mxu0 0.0
    %148 = vmatprep.subr.mxu0 0.0
    %149 = vmatpush1.msra.mxu0 0.0
    %150 = vmatprep.subr.mxu0 0.0
    %151 = vmatpush1.msra.mxu0 0.0
    %152 = vmatprep.subr.mxu0 0.0
    %153 = vmatpush1.msra.mxu0 0.0
    %154 = vmatprep.subr.mxu0 0.0
    %155 = vmatpush1.msra.mxu0 0.0
    %156 = vmatprep.subr.mxu0 0.0
    %157 = vmatpush1.msra.mxu0 0.0
    %158 = vmatprep.subr.mxu0 0.0
    %159 = vmatpush1.msra.mxu0 0.0
    %160 = vmatprep.subr.mxu0 0.0
    %161 = vmatpush1.msra.mxu0 0.0
    %162 = vmatprep.subr.mxu0 0.0
    %163 = vmatpush1.msra.mxu0 0.0
    %164 = vmatprep.subr.mxu0 0.0
    %165 = vmatpush1.msra.mxu0 0.0
    %166 = vmatprep.subr.mxu0 0.0
    %167 = vmatpush1.msra.mxu0 0.0
    %168 = vmatprep.mubr.f32.mxu0 0.0
    %169 = vmatmul.mubr.f32.gmra.mrb[0].mxu0 %v80
    %v170 = vpop.f32.mrb[0].mxu0
    %v171 = vadd.f32 %v102, %v170
    %v172 = vpop.f32.mrb[0].mxu0
    %173 = vdwg.mxu0
    %v174 = vxor.u32 %v171, 2147483648
    %v175 = vmul.f32 %v174, 1.442695
    %v176 = vpow.pop %v175
    %v177 = vadd.f32 %v176, 1.0
    %v178 = vrcp.pop %v177
    %v179 = vmul.f32 1.0, %v178
    %v180 = vmul.f32 %v171, %v179
    %v181 = vld [vmem:[#allocation7] sm:$0xff]
    %v182 = vld [vmem:[#allocation7 + $0x8] sm:$0xff]
    %v183 = vld [vmem:[#allocation7 + $0x10] sm:$0xff]
    %v184 = vld [vmem:[#allocation7 + $0x18] sm:$0xff]
    %v185 = vld [vmem:[#allocation7 + $0x20] sm:$0xff]
    %v186 = vld [vmem:[#allocation7 + $0x28] sm:$0xff]
    %v187 = vld [vmem:[#allocation7 + $0x30] sm:$0xff]
    %v188 = vld [vmem:[#allocation7 + $0x38] sm:$0xff]
    %v189 = vld [vmem:[#allocation7 + $0x40] sm:$0xff]
    %v190 = vld [vmem:[#allocation7 + $0x48] sm:$0xff]
    %v191 = vld [vmem:[#allocation7 + $0x50] sm:$0xff]
    %v192 = vld [vmem:[#allocation7 + $0x58] sm:$0xff]
    %v193 = vld [vmem:[#allocation7 + $0x60] sm:$0xff]
    %v194 = vld [vmem:[#allocation7 + $0x68] sm:$0xff]
    %v195 = vld [vmem:[#allocation7 + $0x70] sm:$0xff]
    %v196 = vld [vmem:[#allocation7 + $0x78] sm:$0xff]
    %v197 = vld [vmem:[%s5] sm:$0x1]
    %v199 = vlaneseq
    %v200 = vshrl.u32 %v199, 7
    %v201 = vsub.s32 0, %v200
    %v202 = vrot.slane %v197, %v201
    %204 = vmatprep.subr.mxu0 0.0
    %205 = vmatpush1.msra.mxu0 %v181
    %206 = vmatprep.subr.mxu0 0.0
    %207 = vmatpush1.msra.mxu0 %v182
    %208 = vmatprep.subr.mxu0 0.0
    %209 = vmatpush1.msra.mxu0 %v183
    %210 = vmatprep.subr.mxu0 0.0
    %211 = vmatpush1.msra.mxu0 %v184
    %212 = vmatprep.subr.mxu0 0.0
    %213 = vmatpush1.msra.mxu0 %v185
    %214 = vmatprep.subr.mxu0 0.0
    %215 = vmatpush1.msra.mxu0 %v186
    %216 = vmatprep.subr.mxu0 0.0
    %217 = vmatpush1.msra.mxu0 %v187
    %218 = vmatprep.subr.mxu0 0.0
    %219 = vmatpush1.msra.mxu0 %v188
    %220 = vmatprep.subr.mxu0 0.0
    %221 = vmatpush1.msra.mxu0 %v189
    %222 = vmatprep.subr.mxu0 0.0
    %223 = vmatpush1.msra.mxu0 %v190
    %224 = vmatprep.subr.mxu0 0.0
    %225 = vmatpush1.msra.mxu0 %v191
    %226 = vmatprep.subr.mxu0 0.0
    %227 = vmatpush1.msra.mxu0 %v192
    %228 = vmatprep.subr.mxu0 0.0
    %229 = vmatpush1.msra.mxu0 %v193
    %230 = vmatprep.subr.mxu0 0.0
    %231 = vmatpush1.msra.mxu0 %v194
    %232 = vmatprep.subr.mxu0 0.0
    %233 = vmatpush1.msra.mxu0 %v195
    %234 = vmatprep.subr.mxu0 0.0
    %235 = vmatpush1.msra.mxu0 %v196
    %236 = vmatprep.subr.mxu0 0.0
    %237 = vmatpush1.msra.mxu0 0.0
    %238 = vmatprep.subr.mxu0 0.0
    %239 = vmatpush1.msra.mxu0 0.0
    %240 = vmatprep.subr.mxu0 0.0
    %241 = vmatpush1.msra.mxu0 0.0
    %242 = vmatprep.subr.mxu0 0.0
    %243 = vmatpush1.msra.mxu0 0.0
    %244 = vmatprep.subr.mxu0 0.0
    %245 = vmatpush1.msra.mxu0 0.0
    %246 = vmatprep.subr.mxu0 0.0
    %247 = vmatpush1.msra.mxu0 0.0
    %248 = vmatprep.subr.mxu0 0.0
    %249 = vmatpush1.msra.mxu0 0.0
    %250 = vmatprep.subr.mxu0 0.0
    %251 = vmatpush1.msra.mxu0 0.0
    %252 = vmatprep.subr.mxu0 0.0
    %253 = vmatpush1.msra.mxu0 0.0
    %254 = vmatprep.subr.mxu0 0.0
    %255 = vmatpush1.msra.mxu0 0.0
    %256 = vmatprep.subr.mxu0 0.0
    %257 = vmatpush1.msra.mxu0 0.0
    %258 = vmatprep.subr.mxu0 0.0
    %259 = vmatpush1.msra.mxu0 0.0
    %260 = vmatprep.subr.mxu0 0.0
    %261 = vmatpush1.msra.mxu0 0.0
    %262 = vmatprep.subr.mxu0 0.0
    %263 = vmatpush1.msra.mxu0 0.0
    %264 = vmatprep.subr.mxu0 0.0
    %265 = vmatpush1.msra.mxu0 0.0
    %266 = vmatprep.subr.mxu0 0.0
    %267 = vmatpush1.msra.mxu0 0.0
    %268 = vmatprep.mubr.f32.mxu0 0.0
    %269 = vmatmul.mubr.f32.gmra.mrb[0].mxu0 %v180
    %v270 = vpop.f32.mrb[0].mxu0
    %v271 = vadd.f32 %v202, %v270
    %v272 = vpop.f32.mrb[0].mxu0
    %273 = vdwg.mxu0
    %v274 = vxor.u32 %v271, 2147483648
    %v275 = vmul.f32 %v274, 1.442695
    %v276 = vpow.pop %v275
    %v277 = vadd.f32 %v276, 1.0
    %v278 = vrcp.pop %v277
    %v279 = vmul.f32 1.0, %v278
    %v280 = vmul.f32 %v271, %v279
    %v281 = vld [vmem:[#allocation8] sm:$0xff]
    %v282 = vld [vmem:[#allocation8 + $0x8] sm:$0xff]
    %v283 = vld [vmem:[#allocation8 + $0x10] sm:$0xff]
    %v284 = vld [vmem:[#allocation8 + $0x18] sm:$0xff]
    %v285 = vld [vmem:[#allocation8 + $0x20] sm:$0xff]
    %v286 = vld [vmem:[#allocation8 + $0x28] sm:$0xff]
    %v287 = vld [vmem:[#allocation8 + $0x30] sm:$0xff]
    %v288 = vld [vmem:[#allocation8 + $0x38] sm:$0xff]
    %v289 = vld [vmem:[#allocation8 + $0x40] sm:$0xff]
    %v290 = vld [vmem:[#allocation8 + $0x48] sm:$0xff]
    %v291 = vld [vmem:[#allocation8 + $0x50] sm:$0xff]
    %v292 = vld [vmem:[#allocation8 + $0x58] sm:$0xff]
    %v293 = vld [vmem:[#allocation8 + $0x60] sm:$0xff]
    %v294 = vld [vmem:[#allocation8 + $0x68] sm:$0xff]
    %v295 = vld [vmem:[#allocation8 + $0x70] sm:$0xff]
    %v296 = vld [vmem:[#allocation8 + $0x78] sm:$0xff]
    %v297 = vld [vmem:[%s6] sm:$0x1]
    %v299 = vlaneseq
    %v300 = vshrl.u32 %v299, 7
    %v301 = vsub.s32 0, %v300
    %v302 = vrot.slane %v297, %v301
    %304 = vmatprep.subr.mxu0 0.0
    %305 = vmatpush1.msra.mxu0 %v281
    %306 = vmatprep.subr.mxu0 0.0
    %307 = vmatpush1.msra.mxu0 %v282
    %308 = vmatprep.subr.mxu0 0.0
    %309 = vmatpush1.msra.mxu0 %v283
    %310 = vmatprep.subr.mxu0 0.0
    %311 = vmatpush1.msra.mxu0 %v284
    %312 = vmatprep.subr.mxu0 0.0
    %313 = vmatpush1.msra.mxu0 %v285
    %314 = vmatprep.subr.mxu0 0.0
    %315 = vmatpush1.msra.mxu0 %v286
    %316 = vmatprep.subr.mxu0 0.0
    %317 = vmatpush1.msra.mxu0 %v287
    %318 = vmatprep.subr.mxu0 0.0
    %319 = vmatpush1.msra.mxu0 %v288
    %320 = vmatprep.subr.mxu0 0.0
    %321 = vmatpush1.msra.mxu0 %v289
    %322 = vmatprep.subr.mxu0 0.0
    %323 = vmatpush1.msra.mxu0 %v290
    %324 = vmatprep.subr.mxu0 0.0
    %325 = vmatpush1.msra.mxu0 %v291
    %326 = vmatprep.subr.mxu0 0.0
    %327 = vmatpush1.msra.mxu0 %v292
    %328 = vmatprep.subr.mxu0 0.0
    %329 = vmatpush1.msra.mxu0 %v293
    %330 = vmatprep.subr.mxu0 0.0
    %331 = vmatpush1.msra.mxu0 %v294
    %332 = vmatprep.subr.mxu0 0.0
    %333 = vmatpush1.msra.mxu0 %v295
    %334 = vmatprep.subr.mxu0 0.0
    %335 = vmatpush1.msra.mxu0 %v296
    %336 = vmatprep.subr.mxu0 0.0
    %337 = vmatpush1.msra.mxu0 0.0
    %338 = vmatprep.subr.mxu0 0.0
    %339 = vmatpush1.msra.mxu0 0.0
    %340 = vmatprep.subr.mxu0 0.0
    %341 = vmatpush1.msra.mxu0 0.0
    %342 = vmatprep.subr.mxu0 0.0
    %343 = vmatpush1.msra.mxu0 0.0
    %344 = vmatprep.subr.mxu0 0.0
    %345 = vmatpush1.msra.mxu0 0.0
    %346 = vmatprep.subr.mxu0 0.0
    %347 = vmatpush1.msra.mxu0 0.0
    %348 = vmatprep.subr.mxu0 0.0
    %349 = vmatpush1.msra.mxu0 0.0
    %350 = vmatprep.subr.mxu0 0.0
    %351 = vmatpush1.msra.mxu0 0.0
    %352 = vmatprep.subr.mxu0 0.0
    %353 = vmatpush1.msra.mxu0 0.0
    %354 = vmatprep.subr.mxu0 0.0
    %355 = vmatpush1.msra.mxu0 0.0
    %356 = vmatprep.subr.mxu0 0.0
    %357 = vmatpush1.msra.mxu0 0.0
    %358 = vmatprep.subr.mxu0 0.0
    %359 = vmatpush1.msra.mxu0 0.0
    %360 = vmatprep.subr.mxu0 0.0
    %361 = vmatpush1.msra.mxu0 0.0
    %362 = vmatprep.subr.mxu0 0.0
    %363 = vmatpush1.msra.mxu0 0.0
    %364 = vmatprep.subr.mxu0 0.0
    %365 = vmatpush1.msra.mxu0 0.0
    %366 = vmatprep.subr.mxu0 0.0
    %367 = vmatpush1.msra.mxu0 0.0
    %368 = vmatprep.mubr.f32.mxu0 0.0
    %369 = vmatmul.mubr.f32.gmra.mrb[0].mxu0 %v280
    %v370 = vpop.f32.mrb[0].mxu0
    %v371 = vadd.f32 %v302, %v370
    %v372 = vpop.f32.mrb[0].mxu0
    %373 = vdwg.mxu0
    %374 = vst [vmem:[#allocation10] sm:$0xff] %v371
    // Predicated region
    $region46: #{tpu_custom_call.1} parent=1 // pred_check
      _
    $region47: #{tpu_custom_call.1} parent=1 // pred_check_branch
      %376 = sbr.rel (0) target = $region49
    $region48: #{tpu_custom_call.1} parent=1 // pred_region
      %s378 = ssub.s32 128, 128
      %379 = vsyncadd [#allocation4], %s378
      %s381 = sshll.u32 [#allocation10], 4
      %s382 = int_to_ptr.vmem [resolvable:$true] %s381
      %384 = dma.vmem_to_hbm [thread:$0]  %s382, 128, %s7, [#allocation4]
    $region49: #{tpu_custom_call.1} parent=1 // pred_fallthru
      _
    // Predicated region
    $region50: #{tpu_custom_call.1} parent=1 // pred_check
      _
    $region51: #{tpu_custom_call.1} parent=1 // pred_check_branch
      %386 = sbr.rel (0) target = $region53
    $region52: #{tpu_custom_call.1} parent=1 // pred_region
      %387 = dma.done [#allocation4], 128
    $region53: #{tpu_custom_call.1} parent=1 // pred_fallthru
      _
    %388 = vsyncpa [#allocation3], 1
    %389 = vsyncpa [#allocation6], 1
    %390 = vsyncpa [#allocation9], 1
    %391 = vsyncpa [#allocation4], 1

</llo_original>
